<compile_context>
chip_gen: v7x
topology: tpu7x:2x2x1
jax: 0.10.0
libtpu: 0.0.40
codegen_flags: <defaults>
</compile_context>

<pallas_src>
import jax
import jax.numpy as jnp
from jax.experimental import pallas as pl
from jax.experimental.pallas import tpu as pltpu

NUM_LAYER = 3          # num_layer in the PyTorch module
D_IN = 25              # 5*5 flattened input
D_HID = 100
D_OUT = 25             # reshaped to (5, 5)

PAD = 128              # lane-padded feature width
ONES_SLOT = PAD - 1    # lane that carries the constant 1.0 used to apply biases


def _round_up(n, m):
    return ((n + m - 1) // m) * m


# --------------------------------------------------------------------------- #
# Kernel
# --------------------------------------------------------------------------- #
def _pred_matrix_kernel(w_ref, x_ref, out_ref):
    # w_ref:   (L, 128, 128) packed augmented weights (bias folded in row 127)
    # x_ref:   (TM, 128)     activation block; col 127 holds 1.0 for real rows
    # out_ref: (TM, 128)     lane-dense output block (cols 0..24 are the result)
    h = x_ref[...]
    num_layers = w_ref.shape[0]          # static -> small unrolled loop
    for i in range(num_layers):
        h = jnp.dot(h, w_ref[i], preferred_element_type=jnp.float32)
    out_ref[...] = h.astype(out_ref.dtype)


# --------------------------------------------------------------------------- #
# Parameters
# --------------------------------------------------------------------------- #
def init_params(key, num_layer=NUM_LAYER):
    """Deterministic parameter init (PyTorch-Linear-style uniform bounds).

    Weights are stored as (in_features, out_features), i.e. the transpose of
    nn.Linear.weight, so each layer is `h = h @ W + b`.
    """
    ks = jax.random.split(key, 2 * (num_layer + 1))

    def lin(kw, kb, fan_in, fan_out):
        bound = 1.0 / jnp.sqrt(fan_in)
        w = jax.random.uniform(kw, (fan_in, fan_out), jnp.float32, -bound, bound)
        b = jax.random.uniform(kb, (1, fan_out), jnp.float32, -bound, bound)
        return w, b

    w0, b0 = lin(ks[0], ks[1], D_IN, D_HID)
    wh_list, bh_list = [], []
    for i in range(num_layer - 1):
        w, b = lin(ks[2 + 2 * i], ks[3 + 2 * i], D_HID, D_HID)
        wh_list.append(w)
        bh_list.append(b)
    if wh_list:
        wh = jnp.stack(wh_list, axis=0)                    # (num_layer-1, 100, 100)
        bh = jnp.stack(bh_list, axis=0)                    # (num_layer-1, 1, 100)
    else:                                                  # num_layer == 1 guard
        wh = jnp.zeros((0, D_HID, D_HID), jnp.float32)
        bh = jnp.zeros((0, 1, D_HID), jnp.float32)
    wo, bo = lin(ks[2 * num_layer], ks[2 * num_layer + 1], D_HID, D_OUT)
    return w0, b0, wh, bh, wo, bo


def pack_params(params, num_layer=NUM_LAYER, dtype=jnp.float32):
    """Pack all layers into one (num_layer+1, 128, 128) slab.

    For each layer (W: (fi,fo), b: (1,fo)) the augmented 128x128 block is:
      rows 0..fi-1, cols 0..fo-1 = W
      row  127,     cols 0..fo-1 = b          (applied via the ones-lane)
      entry [127, 127]           = 1.0        (propagates the ones-lane forward)
    so every layer becomes a single pure matmul: h_new = h @ W_aug.
    """
    w0, b0, wh, bh, wo, bo = params
    layers = [(w0, b0)]
    layers += [(wh[i], bh[i]) for i in range(num_layer - 1)]
    layers += [(wo, bo)]

    slabs = []
    for w, b in layers:
        fi, fo = w.shape
        aug = jnp.zeros((PAD, PAD), jnp.float32)
        aug = aug.at[:fi, :fo].set(w)
        aug = aug.at[ONES_SLOT, :fo].set(jnp.reshape(b, (-1,)))
        aug = aug.at[ONES_SLOT, ONES_SLOT].set(1.0)
        slabs.append(aug)
    # TODO(synk): optionally cast to bfloat16 here to halve the weight DMA;
    # kept f32 to match PyTorch numerics exactly.
    return jnp.stack(slabs, axis=0).astype(dtype)          # (L, 128, 128)


# --------------------------------------------------------------------------- #
# Wrapper
# --------------------------------------------------------------------------- #
def pred_matrix_linear(x, packed_w):
    """x: (5,5) (or (B,5,5) for batched evaluation); returns (5,5) / (B,5,5)."""
    single = (x.ndim == 2)
    xb = jnp.reshape(x, (1, D_IN)) if single else jnp.reshape(x, (x.shape[0], D_IN))
    xb = xb.astype(jnp.float32)
    B = xb.shape[0]

    # Sublane-align the batch dim and pick a tile size per grid step.
    if B <= 128:
        TM = _round_up(B, 8)
        B_pad = TM
    else:
        TM = 128
        B_pad = _round_up(B, TM)

    # Lane-dense padded activations; ones-lane drives the folded biases.
    x_pad = jnp.zeros((B_pad, PAD), jnp.float32)
    x_pad = x_pad.at[:B, :D_IN].set(xb)
    x_pad = x_pad.at[:B, ONES_SLOT].set(1.0)

    num_layers = packed_w.shape[0]
    grid = (B_pad // TM,)

    out = pl.pallas_call(
        _pred_matrix_kernel,
        out_shape=jax.ShapeDtypeStruct((B_pad, PAD), jnp.float32),
        grid_spec=pltpu.PrefetchScalarGridSpec(
            num_scalar_prefetch=0,
            grid=grid,
            in_specs=[
                # Single packed weight slab; constant block index -> DMA'd once,
                # stays VMEM-resident across all batch-grid steps.
                pl.BlockSpec((num_layers, PAD, PAD), lambda i: (0, 0, 0)),
                # Activations tiled along the sublane/batch dim.
                pl.BlockSpec((TM, PAD), lambda i: (i, 0)),
            ],
            out_specs=pl.BlockSpec((TM, PAD), lambda i: (i, 0)),
        ),
        compiler_params=pltpu.CompilerParams(
            dimension_semantics=("parallel",)),   # lets v7x split batch over 2 TCs
    )(packed_w, x_pad)

    res = out[:B, :D_OUT]
    return res.reshape(5, 5) if single else res.reshape(B, 5, 5)


# --------------------------------------------------------------------------- #
# Pure-JAX reference (matches the PyTorch forward)
# --------------------------------------------------------------------------- #
def _reference(x, params, num_layer=NUM_LAYER):
    w0, b0, wh, bh, wo, bo = params
    h = jnp.reshape(x, (1, D_IN)).astype(jnp.float32) @ w0 + b0
    for i in range(num_layer - 1):
        h = h @ wh[i] + bh[i]
    return (h @ wo + bo).reshape(5, 5)


if __name__ == "__main__":
    key = jax.random.PRNGKey(0)
    k_x, k_p = jax.random.split(key)
    x = jax.random.normal(k_x, (5, 5), jnp.float32)     # 5x5 input -> flat 25
    params = init_params(k_p, NUM_LAYER)
    packed_w = pack_params(params, NUM_LAYER)

    out = pred_matrix_linear(x, packed_w)
    out = jax.block_until_ready(out)

    ref = _reference(x, params, NUM_LAYER)
    assert out.shape == (5, 5)
    assert jnp.allclose(out, ref, atol=1e-4, rtol=1e-4)
    print("KERNEL_OK")
</pallas_src>

<mosaic_0001>
module attributes {stable_mosaic.version = 11 : i64} {
  func.func @_pred_matrix_kernel(%arg0: i32, %arg1: memref<4x128x128xf32, #tpu.memory_space<vmem>>, %arg2: memref<8x128xf32, #tpu.memory_space<vmem>>, %arg3: memref<8x128xf32, #tpu.memory_space<vmem>>) attributes {dimension_semantics = [#tpu.dimension_semantics<parallel>], iteration_bounds = array<i64: 1>, scalar_prefetch = 0 : i64, scratch_operands = 0 : i64, tpu.core_type = #tpu.core_type<tc>, window_params = [{pipeline_mode = #tpu.pipeline_mode<synchronous>, transform_indices = @transform_0, window_bounds = array<i64: 4, 128, 128>}, {transform_indices = @transform_1, window_bounds = array<i64: 8, 128>}, {transform_indices = @transform_2, window_bounds = array<i64: 8, 128>}]} {
    %c0 = arith.constant 0 : index
    %c0_0 = arith.constant 0 : index
    %0 = vector.load %arg2[%c0, %c0_0] : memref<8x128xf32, #tpu.memory_space<vmem>>, vector<8x128xf32>
    %c0_1 = arith.constant 0 : index
    %c0_2 = arith.constant 0 : index
    %c0_3 = arith.constant 0 : index
    %1 = vector.load %arg1[%c0_1, %c0_2, %c0_3] : memref<4x128x128xf32, #tpu.memory_space<vmem>>, vector<1x128x128xf32>
    %2 = vector.shape_cast %1 : vector<1x128x128xf32> to vector<128x128xf32>
    %cst = arith.constant dense<0.000000e+00> : vector<8x128xf32>
    %3 = tpu.matmul %0, %2, %cst {dimension_numbers = #tpu.dot_dimension_numbers<[1], [0], [0], [1], [0, 0, 1, 1], [], []>} : vector<8x128xf32>, vector<128x128xf32>, vector<8x128xf32> -> vector<8x128xf32>
    %c1 = arith.constant 1 : index
    %c0_4 = arith.constant 0 : index
    %c0_5 = arith.constant 0 : index
    %4 = vector.load %arg1[%c1, %c0_4, %c0_5] : memref<4x128x128xf32, #tpu.memory_space<vmem>>, vector<1x128x128xf32>
    %5 = vector.shape_cast %4 : vector<1x128x128xf32> to vector<128x128xf32>
    %cst_6 = arith.constant dense<0.000000e+00> : vector<8x128xf32>
    %6 = tpu.matmul %3, %5, %cst_6 {dimension_numbers = #tpu.dot_dimension_numbers<[1], [0], [0], [1], [0, 0, 1, 1], [], []>} : vector<8x128xf32>, vector<128x128xf32>, vector<8x128xf32> -> vector<8x128xf32>
    %c2 = arith.constant 2 : index
    %c0_7 = arith.constant 0 : index
    %c0_8 = arith.constant 0 : index
    %7 = vector.load %arg1[%c2, %c0_7, %c0_8] : memref<4x128x128xf32, #tpu.memory_space<vmem>>, vector<1x128x128xf32>
    %8 = vector.shape_cast %7 : vector<1x128x128xf32> to vector<128x128xf32>
    %cst_9 = arith.constant dense<0.000000e+00> : vector<8x128xf32>
    %9 = tpu.matmul %6, %8, %cst_9 {dimension_numbers = #tpu.dot_dimension_numbers<[1], [0], [0], [1], [0, 0, 1, 1], [], []>} : vector<8x128xf32>, vector<128x128xf32>, vector<8x128xf32> -> vector<8x128xf32>
    %c3 = arith.constant 3 : index
    %c0_10 = arith.constant 0 : index
    %c0_11 = arith.constant 0 : index
    %10 = vector.load %arg1[%c3, %c0_10, %c0_11] : memref<4x128x128xf32, #tpu.memory_space<vmem>>, vector<1x128x128xf32>
    %11 = vector.shape_cast %10 : vector<1x128x128xf32> to vector<128x128xf32>
    %cst_12 = arith.constant dense<0.000000e+00> : vector<8x128xf32>
    %12 = tpu.matmul %9, %11, %cst_12 {dimension_numbers = #tpu.dot_dimension_numbers<[1], [0], [0], [1], [0, 0, 1, 1], [], []>} : vector<8x128xf32>, vector<128x128xf32>, vector<8x128xf32> -> vector<8x128xf32>
    %c0_13 = arith.constant 0 : index
    %c0_14 = arith.constant 0 : index
    %13 = vector.load %arg3[%c0_13, %c0_14] : memref<8x128xf32, #tpu.memory_space<vmem>>, vector<8x128xf32>
    tpu.vector_store %arg3[%c0_13, %c0_14], %12 {strides = array<i32>} : memref<8x128xf32, #tpu.memory_space<vmem>>, vector<8x128xf32>,
    return
  }
  func.func @transform_0(%arg0: i32) -> (i32, i32, i32) {
    %c0_i32 = arith.constant 0 : i32
    %c0_i32_0 = arith.constant 0 : i32
    %c0_i32_1 = arith.constant 0 : i32
    %c0_i32_2 = arith.constant 0 : i32
    return %c0_i32, %c0_i32_0, %c0_i32_1 : i32, i32, i32
  }
  func.func @transform_1(%arg0: i32) -> (i32, i32) {
    %c0_i32 = arith.constant 0 : i32
    %c0_i32_0 = arith.constant 0 : i32
    return %arg0, %c0_i32 : i32, i32
  }
  func.func @transform_2(%arg0: i32) -> (i32, i32) {
    %c0_i32 = arith.constant 0 : i32
    %c0_i32_0 = arith.constant 0 : i32
    return %arg0, %c0_i32 : i32, i32
  }
}

</mosaic_0001>

<llo_original>
// kernel: tpu_custom_call.1
$region0: #{tpu_custom_call.1}
  #allocation0 [shape = 'u32[]', space=smem, size = 0x4, offset = 0x4, fixed_abs, tag = 'smem constant byte address 0x4 - core index']
  #allocation1 [shape = 'u32[144,128]{1,0:T(1,128)}', space=vmem, size = 0x12000, scoped, tag = 'internal scratch']
  %s0 = inlined_call_operand.hbm [shape: f32[4,128,128], index: 0, kind: input, shape index: {}]
  %s1 = inlined_call_operand.hbm [shape: f32[8,128], index: 1, kind: input, shape index: {}]
  %s2 = inlined_call_operand.hbm [shape: f32[8,128], index: 2, kind: output, shape index: {}]
  %s3 = sld [smem:[#allocation0]]
  $region26: #{tpu_custom_call.1} parent=0
    _
  %s5 = ssub.s32 1, %s3
  %s6 = scalar_select 0, %s5, %s3
  $region1: #{tpu_custom_call.1} parent=0
    #allocation2 [shape = 'u8[262144]{0}', space=vmem, size = 0x40000, scoped, tag = 'input window, operand 0, single buffered']
    #allocation3 [shape = 's32[1]{0}', space=sflag, size = 0x4, scoped, tag = 'scoped memory for tpu_custom_call.1']
    #allocation4 [shape = 's32[1]{0}', space=sflag, size = 0x4, scoped, tag = 'scoped memory for tpu_custom_call.1']
    #allocation5 [shape = 'u8[4096]{0}', space=vmem, size = 0x1000, scoped, tag = 'input window, operand 1, single buffered']
    #allocation6 [shape = 's32[1]{0}', space=sflag, size = 0x4, scoped, tag = 'scoped memory for tpu_custom_call.1']
    #allocation7 [shape = 'u8[4096]{0}', space=vmem, size = 0x1000, scoped, tag = 'output window, operand 0, single buffered']
    %7 = vsyncpa [#allocation3], 0
    %8 = vsyncpa [#allocation6], 0
    %9 = vsyncpa [#allocation4], 0
    // Predicated region
    $region2: #{tpu_custom_call.1} parent=1 // pred_check
      _
    $region3: #{tpu_custom_call.1} parent=1 // pred_check_branch
      %11 = sbr.rel (0) target = $region5
    $region4: #{tpu_custom_call.1} parent=1 // pred_region
      %s13 = ssub.s32 8192, 8192
      %14 = vsyncadd [#allocation3], %s13
      %s15 = sshll.u32 [#allocation2], 4
      %s16 = int_to_ptr.vmem [resolvable:$true] %s15
      %21 = dma.hbm_to_vmem [thread:$0]  %s0, 8192, %s16, [#allocation3], 128, 128, 8
    $region5: #{tpu_custom_call.1} parent=1 // pred_fallthru
      _
    // Predicated region
    $region6: #{tpu_custom_call.1} parent=1 // pred_check
      _
    $region7: #{tpu_custom_call.1} parent=1 // pred_check_branch
      %23 = sbr.rel (0) target = $region9
    $region8: #{tpu_custom_call.1} parent=1 // pred_region
      %s25 = ssub.s32 128, 128
      %26 = vsyncadd [#allocation6], %s25
      %s28 = sshll.u32 [#allocation5], 4
      %s29 = int_to_ptr.vmem [resolvable:$true] %s28
      %31 = dma.hbm_to_vmem [thread:$0]  %s1, 128, %s29, [#allocation6]
    $region9: #{tpu_custom_call.1} parent=1 // pred_fallthru
      _
    // Predicated region
    $region10: #{tpu_custom_call.1} parent=1 // pred_check
      _
    $region11: #{tpu_custom_call.1} parent=1 // pred_check_branch
      %33 = sbr.rel (0) target = $region13
    $region12: #{tpu_custom_call.1} parent=1 // pred_region
      %34 = dma.done [#allocation3], 8192
    $region13: #{tpu_custom_call.1} parent=1 // pred_fallthru
      _
    // Predicated region
    $region14: #{tpu_custom_call.1} parent=1 // pred_check
      _
    $region15: #{tpu_custom_call.1} parent=1 // pred_check_branch
      %36 = sbr.rel (0) target = $region17
    $region16: #{tpu_custom_call.1} parent=1 // pred_region
      %37 = dma.done [#allocation6], 128
    $region17: #{tpu_custom_call.1} parent=1 // pred_fallthru
      _
    %v38 = vld [vmem:[#allocation5] sm:$0xff]
    %v39 = vld [vmem:[#allocation2] sm:$0xff]
    %v40 = vld [vmem:[#allocation2 + $0x8] sm:$0xff]
    %v41 = vld [vmem:[#allocation2 + $0x10] sm:$0xff]
    %v42 = vld [vmem:[#allocation2 + $0x18] sm:$0xff]
    %v43 = vld [vmem:[#allocation2 + $0x20] sm:$0xff]
    %v44 = vld [vmem:[#allocation2 + $0x28] sm:$0xff]
    %v45 = vld [vmem:[#allocation2 + $0x30] sm:$0xff]
    %v46 = vld [vmem:[#allocation2 + $0x38] sm:$0xff]
    %v47 = vld [vmem:[#allocation2 + $0x40] sm:$0xff]
    %v48 = vld [vmem:[#allocation2 + $0x48] sm:$0xff]
    %v49 = vld [vmem:[#allocation2 + $0x50] sm:$0xff]
    %v50 = vld [vmem:[#allocation2 + $0x58] sm:$0xff]
    %v51 = vld [vmem:[#allocation2 + $0x60] sm:$0xff]
    %v52 = vld [vmem:[#allocation2 + $0x68] sm:$0xff]
    %v53 = vld [vmem:[#allocation2 + $0x70] sm:$0xff]
    %v54 = vld [vmem:[#allocation2 + $0x78] sm:$0xff]
    %55 = vmatprep.subr.mxu0 0.0
    %56 = vmatpush1.msra.mxu0 %v39
    %57 = vmatprep.subr.mxu0 0.0
    %58 = vmatpush1.msra.mxu0 %v40
    %59 = vmatprep.subr.mxu0 0.0
    %60 = vmatpush1.msra.mxu0 %v41
    %61 = vmatprep.subr.mxu0 0.0
    %62 = vmatpush1.msra.mxu0 %v42
    %63 = vmatprep.subr.mxu0 0.0
    %64 = vmatpush1.msra.mxu0 %v43
    %65 = vmatprep.subr.mxu0 0.0
    %66 = vmatpush1.msra.mxu0 %v44
    %67 = vmatprep.subr.mxu0 0.0
    %68 = vmatpush1.msra.mxu0 %v45
    %69 = vmatprep.subr.mxu0 0.0
    %70 = vmatpush1.msra.mxu0 %v46
    %71 = vmatprep.subr.mxu0 0.0
    %72 = vmatpush1.msra.mxu0 %v47
    %73 = vmatprep.subr.mxu0 0.0
    %74 = vmatpush1.msra.mxu0 %v48
    %75 = vmatprep.subr.mxu0 0.0
    %76 = vmatpush1.msra.mxu0 %v49
    %77 = vmatprep.subr.mxu0 0.0
    %78 = vmatpush1.msra.mxu0 %v50
    %79 = vmatprep.subr.mxu0 0.0
    %80 = vmatpush1.msra.mxu0 %v51
    %81 = vmatprep.subr.mxu0 0.0
    %82 = vmatpush1.msra.mxu0 %v52
    %83 = vmatprep.subr.mxu0 0.0
    %84 = vmatpush1.msra.mxu0 %v53
    %85 = vmatprep.subr.mxu0 0.0
    %86 = vmatpush1.msra.mxu0 %v54
    %87 = vmatprep.subr.mxu0 0.0
    %88 = vmatpush1.msra.mxu0 0.0
    %89 = vmatprep.subr.mxu0 0.0
    %90 = vmatpush1.msra.mxu0 0.0
    %91 = vmatprep.subr.mxu0 0.0
    %92 = vmatpush1.msra.mxu0 0.0
    %93 = vmatprep.subr.mxu0 0.0
    %94 = vmatpush1.msra.mxu0 0.0
    %95 = vmatprep.subr.mxu0 0.0
    %96 = vmatpush1.msra.mxu0 0.0
    %97 = vmatprep.subr.mxu0 0.0
    %98 = vmatpush1.msra.mxu0 0.0
    %99 = vmatprep.subr.mxu0 0.0
    %100 = vmatpush1.msra.mxu0 0.0
    %101 = vmatprep.subr.mxu0 0.0
    %102 = vmatpush1.msra.mxu0 0.0
    %103 = vmatprep.subr.mxu0 0.0
    %104 = vmatpush1.msra.mxu0 0.0
    %105 = vmatprep.subr.mxu0 0.0
    %106 = vmatpush1.msra.mxu0 0.0
    %107 = vmatprep.subr.mxu0 0.0
    %108 = vmatpush1.msra.mxu0 0.0
    %109 = vmatprep.subr.mxu0 0.0
    %110 = vmatpush1.msra.mxu0 0.0
    %111 = vmatprep.subr.mxu0 0.0
    %112 = vmatpush1.msra.mxu0 0.0
    %113 = vmatprep.subr.mxu0 0.0
    %114 = vmatpush1.msra.mxu0 0.0
    %115 = vmatprep.subr.mxu0 0.0
    %116 = vmatpush1.msra.mxu0 0.0
    %117 = vmatprep.subr.mxu0 0.0
    %118 = vmatpush1.msra.mxu0 0.0
    %119 = vmatprep.mubr.f32.mxu0 0.0
    %120 = vmatmul.mubr.f32.gmra.mrb[0].mxu0 %v38
    %v121 = vpop.f32.mrb[0].mxu0
    %v122 = vadd.f32 0.0, %v121
    %v123 = vpop.f32.mrb[0].mxu0
    %124 = vdwg.mxu0
    %s125 = scalar_lea.vmem [#allocation2], 128
    %v126 = vld [vmem:[%s125] sm:$0xff]
    %v127 = vld [vmem:[%s125 + $0x8] sm:$0xff]
    %v128 = vld [vmem:[%s125 + $0x10] sm:$0xff]
    %v129 = vld [vmem:[%s125 + $0x18] sm:$0xff]
    %v130 = vld [vmem:[%s125 + $0x20] sm:$0xff]
    %v131 = vld [vmem:[%s125 + $0x28] sm:$0xff]
    %v132 = vld [vmem:[%s125 + $0x30] sm:$0xff]
    %v133 = vld [vmem:[%s125 + $0x38] sm:$0xff]
    %v134 = vld [vmem:[%s125 + $0x40] sm:$0xff]
    %v135 = vld [vmem:[%s125 + $0x48] sm:$0xff]
    %v136 = vld [vmem:[%s125 + $0x50] sm:$0xff]
    %v137 = vld [vmem:[%s125 + $0x58] sm:$0xff]
    %v138 = vld [vmem:[%s125 + $0x60] sm:$0xff]
    %v139 = vld [vmem:[%s125 + $0x68] sm:$0xff]
    %v140 = vld [vmem:[%s125 + $0x70] sm:$0xff]
    %v141 = vld [vmem:[%s125 + $0x78] sm:$0xff]
    %142 = vmatprep.subr.mxu0 0.0
    %143 = vmatpush1.msra.mxu0 %v126
    %144 = vmatprep.subr.mxu0 0.0
    %145 = vmatpush1.msra.mxu0 %v127
    %146 = vmatprep.subr.mxu0 0.0
    %147 = vmatpush1.msra.mxu0 %v128
    %148 = vmatprep.subr.mxu0 0.0
    %149 = vmatpush1.msra.mxu0 %v129
    %150 = vmatprep.subr.mxu0 0.0
    %151 = vmatpush1.msra.mxu0 %v130
    %152 = vmatprep.subr.mxu0 0.0
    %153 = vmatpush1.msra.mxu0 %v131
    %154 = vmatprep.subr.mxu0 0.0
    %155 = vmatpush1.msra.mxu0 %v132
    %156 = vmatprep.subr.mxu0 0.0
    %157 = vmatpush1.msra.mxu0 %v133
    %158 = vmatprep.subr.mxu0 0.0
    %159 = vmatpush1.msra.mxu0 %v134
    %160 = vmatprep.subr.mxu0 0.0
    %161 = vmatpush1.msra.mxu0 %v135
    %162 = vmatprep.subr.mxu0 0.0
    %163 = vmatpush1.msra.mxu0 %v136
    %164 = vmatprep.subr.mxu0 0.0
    %165 = vmatpush1.msra.mxu0 %v137
    %166 = vmatprep.subr.mxu0 0.0
    %167 = vmatpush1.msra.mxu0 %v138
    %168 = vmatprep.subr.mxu0 0.0
    %169 = vmatpush1.msra.mxu0 %v139
    %170 = vmatprep.subr.mxu0 0.0
    %171 = vmatpush1.msra.mxu0 %v140
    %172 = vmatprep.subr.mxu0 0.0
    %173 = vmatpush1.msra.mxu0 %v141
    %174 = vmatprep.subr.mxu0 0.0
    %175 = vmatpush1.msra.mxu0 0.0
    %176 = vmatprep.subr.mxu0 0.0
    %177 = vmatpush1.msra.mxu0 0.0
    %178 = vmatprep.subr.mxu0 0.0
    %179 = vmatpush1.msra.mxu0 0.0
    %180 = vmatprep.subr.mxu0 0.0
    %181 = vmatpush1.msra.mxu0 0.0
    %182 = vmatprep.subr.mxu0 0.0
    %183 = vmatpush1.msra.mxu0 0.0
    %184 = vmatprep.subr.mxu0 0.0
    %185 = vmatpush1.msra.mxu0 0.0
    %186 = vmatprep.subr.mxu0 0.0
    %187 = vmatpush1.msra.mxu0 0.0
    %188 = vmatprep.subr.mxu0 0.0
    %189 = vmatpush1.msra.mxu0 0.0
    %190 = vmatprep.subr.mxu0 0.0
    %191 = vmatpush1.msra.mxu0 0.0
    %192 = vmatprep.subr.mxu0 0.0
    %193 = vmatpush1.msra.mxu0 0.0
    %194 = vmatprep.subr.mxu0 0.0
    %195 = vmatpush1.msra.mxu0 0.0
    %196 = vmatprep.subr.mxu0 0.0
    %197 = vmatpush1.msra.mxu0 0.0
    %198 = vmatprep.subr.mxu0 0.0
    %199 = vmatpush1.msra.mxu0 0.0
    %200 = vmatprep.subr.mxu0 0.0
    %201 = vmatpush1.msra.mxu0 0.0
    %202 = vmatprep.subr.mxu0 0.0
    %203 = vmatpush1.msra.mxu0 0.0
    %204 = vmatprep.subr.mxu0 0.0
    %205 = vmatpush1.msra.mxu0 0.0
    %206 = vmatprep.mubr.f32.mxu0 0.0
    %207 = vmatmul.mubr.f32.gmra.mrb[0].mxu0 %v122
    %v208 = vpop.f32.mrb[0].mxu0
    %v209 = vadd.f32 0.0, %v208
    %v210 = vpop.f32.mrb[0].mxu0
    %211 = vdwg.mxu0
    %s212 = scalar_lea.vmem [#allocation2], 256
    %v213 = vld [vmem:[%s212] sm:$0xff]
    %v214 = vld [vmem:[%s212 + $0x8] sm:$0xff]
    %v215 = vld [vmem:[%s212 + $0x10] sm:$0xff]
    %v216 = vld [vmem:[%s212 + $0x18] sm:$0xff]
    %v217 = vld [vmem:[%s212 + $0x20] sm:$0xff]
    %v218 = vld [vmem:[%s212 + $0x28] sm:$0xff]
    %v219 = vld [vmem:[%s212 + $0x30] sm:$0xff]
    %v220 = vld [vmem:[%s212 + $0x38] sm:$0xff]
    %v221 = vld [vmem:[%s212 + $0x40] sm:$0xff]
    %v222 = vld [vmem:[%s212 + $0x48] sm:$0xff]
    %v223 = vld [vmem:[%s212 + $0x50] sm:$0xff]
    %v224 = vld [vmem:[%s212 + $0x58] sm:$0xff]
    %v225 = vld [vmem:[%s212 + $0x60] sm:$0xff]
    %v226 = vld [vmem:[%s212 + $0x68] sm:$0xff]
    %v227 = vld [vmem:[%s212 + $0x70] sm:$0xff]
    %v228 = vld [vmem:[%s212 + $0x78] sm:$0xff]
    %229 = vmatprep.subr.mxu0 0.0
    %230 = vmatpush1.msra.mxu0 %v213
    %231 = vmatprep.subr.mxu0 0.0
    %232 = vmatpush1.msra.mxu0 %v214
    %233 = vmatprep.subr.mxu0 0.0
    %234 = vmatpush1.msra.mxu0 %v215
    %235 = vmatprep.subr.mxu0 0.0
    %236 = vmatpush1.msra.mxu0 %v216
    %237 = vmatprep.subr.mxu0 0.0
    %238 = vmatpush1.msra.mxu0 %v217
    %239 = vmatprep.subr.mxu0 0.0
    %240 = vmatpush1.msra.mxu0 %v218
    %241 = vmatprep.subr.mxu0 0.0
    %242 = vmatpush1.msra.mxu0 %v219
    %243 = vmatprep.subr.mxu0 0.0
    %244 = vmatpush1.msra.mxu0 %v220
    %245 = vmatprep.subr.mxu0 0.0
    %246 = vmatpush1.msra.mxu0 %v221
    %247 = vmatprep.subr.mxu0 0.0
    %248 = vmatpush1.msra.mxu0 %v222
    %249 = vmatprep.subr.mxu0 0.0
    %250 = vmatpush1.msra.mxu0 %v223
    %251 = vmatprep.subr.mxu0 0.0
    %252 = vmatpush1.msra.mxu0 %v224
    %253 = vmatprep.subr.mxu0 0.0
    %254 = vmatpush1.msra.mxu0 %v225
    %255 = vmatprep.subr.mxu0 0.0
    %256 = vmatpush1.msra.mxu0 %v226
    %257 = vmatprep.subr.mxu0 0.0
    %258 = vmatpush1.msra.mxu0 %v227
    %259 = vmatprep.subr.mxu0 0.0
    %260 = vmatpush1.msra.mxu0 %v228
    %261 = vmatprep.subr.mxu0 0.0
    %262 = vmatpush1.msra.mxu0 0.0
    %263 = vmatprep.subr.mxu0 0.0
    %264 = vmatpush1.msra.mxu0 0.0
    %265 = vmatprep.subr.mxu0 0.0
    %266 = vmatpush1.msra.mxu0 0.0
    %267 = vmatprep.subr.mxu0 0.0
    %268 = vmatpush1.msra.mxu0 0.0
    %269 = vmatprep.subr.mxu0 0.0
    %270 = vmatpush1.msra.mxu0 0.0
    %271 = vmatprep.subr.mxu0 0.0
    %272 = vmatpush1.msra.mxu0 0.0
    %273 = vmatprep.subr.mxu0 0.0
    %274 = vmatpush1.msra.mxu0 0.0
    %275 = vmatprep.subr.mxu0 0.0
    %276 = vmatpush1.msra.mxu0 0.0
    %277 = vmatprep.subr.mxu0 0.0
    %278 = vmatpush1.msra.mxu0 0.0
    %279 = vmatprep.subr.mxu0 0.0
    %280 = vmatpush1.msra.mxu0 0.0
    %281 = vmatprep.subr.mxu0 0.0
    %282 = vmatpush1.msra.mxu0 0.0
    %283 = vmatprep.subr.mxu0 0.0
    %284 = vmatpush1.msra.mxu0 0.0
    %285 = vmatprep.subr.mxu0 0.0
    %286 = vmatpush1.msra.mxu0 0.0
    %287 = vmatprep.subr.mxu0 0.0
    %288 = vmatpush1.msra.mxu0 0.0
    %289 = vmatprep.subr.mxu0 0.0
    %290 = vmatpush1.msra.mxu0 0.0
    %291 = vmatprep.subr.mxu0 0.0
    %292 = vmatpush1.msra.mxu0 0.0
    %293 = vmatprep.mubr.f32.mxu0 0.0
    %294 = vmatmul.mubr.f32.gmra.mrb[0].mxu0 %v209
    %v295 = vpop.f32.mrb[0].mxu0
    %v296 = vadd.f32 0.0, %v295
    %v297 = vpop.f32.mrb[0].mxu0
    %298 = vdwg.mxu0
    %s299 = scalar_lea.vmem [#allocation2], 384
    %v300 = vld [vmem:[%s299] sm:$0xff]
    %v301 = vld [vmem:[%s299 + $0x8] sm:$0xff]
    %v302 = vld [vmem:[%s299 + $0x10] sm:$0xff]
    %v303 = vld [vmem:[%s299 + $0x18] sm:$0xff]
    %v304 = vld [vmem:[%s299 + $0x20] sm:$0xff]
    %v305 = vld [vmem:[%s299 + $0x28] sm:$0xff]
    %v306 = vld [vmem:[%s299 + $0x30] sm:$0xff]
    %v307 = vld [vmem:[%s299 + $0x38] sm:$0xff]
    %v308 = vld [vmem:[%s299 + $0x40] sm:$0xff]
    %v309 = vld [vmem:[%s299 + $0x48] sm:$0xff]
    %v310 = vld [vmem:[%s299 + $0x50] sm:$0xff]
    %v311 = vld [vmem:[%s299 + $0x58] sm:$0xff]
    %v312 = vld [vmem:[%s299 + $0x60] sm:$0xff]
    %v313 = vld [vmem:[%s299 + $0x68] sm:$0xff]
    %v314 = vld [vmem:[%s299 + $0x70] sm:$0xff]
    %v315 = vld [vmem:[%s299 + $0x78] sm:$0xff]
    %316 = vmatprep.subr.mxu0 0.0
    %317 = vmatpush1.msra.mxu0 %v300
    %318 = vmatprep.subr.mxu0 0.0
    %319 = vmatpush1.msra.mxu0 %v301
    %320 = vmatprep.subr.mxu0 0.0
    %321 = vmatpush1.msra.mxu0 %v302
    %322 = vmatprep.subr.mxu0 0.0
    %323 = vmatpush1.msra.mxu0 %v303
    %324 = vmatprep.subr.mxu0 0.0
    %325 = vmatpush1.msra.mxu0 %v304
    %326 = vmatprep.subr.mxu0 0.0
    %327 = vmatpush1.msra.mxu0 %v305
    %328 = vmatprep.subr.mxu0 0.0
    %329 = vmatpush1.msra.mxu0 %v306
    %330 = vmatprep.subr.mxu0 0.0
    %331 = vmatpush1.msra.mxu0 %v307
    %332 = vmatprep.subr.mxu0 0.0
    %333 = vmatpush1.msra.mxu0 %v308
    %334 = vmatprep.subr.mxu0 0.0
    %335 = vmatpush1.msra.mxu0 %v309
    %336 = vmatprep.subr.mxu0 0.0
    %337 = vmatpush1.msra.mxu0 %v310
    %338 = vmatprep.subr.mxu0 0.0
    %339 = vmatpush1.msra.mxu0 %v311
    %340 = vmatprep.subr.mxu0 0.0
    %341 = vmatpush1.msra.mxu0 %v312
    %342 = vmatprep.subr.mxu0 0.0
    %343 = vmatpush1.msra.mxu0 %v313
    %344 = vmatprep.subr.mxu0 0.0
    %345 = vmatpush1.msra.mxu0 %v314
    %346 = vmatprep.subr.mxu0 0.0
    %347 = vmatpush1.msra.mxu0 %v315
    %348 = vmatprep.subr.mxu0 0.0
    %349 = vmatpush1.msra.mxu0 0.0
    %350 = vmatprep.subr.mxu0 0.0
    %351 = vmatpush1.msra.mxu0 0.0
    %352 = vmatprep.subr.mxu0 0.0
    %353 = vmatpush1.msra.mxu0 0.0
    %354 = vmatprep.subr.mxu0 0.0
    %355 = vmatpush1.msra.mxu0 0.0
    %356 = vmatprep.subr.mxu0 0.0
    %357 = vmatpush1.msra.mxu0 0.0
    %358 = vmatprep.subr.mxu0 0.0
    %359 = vmatpush1.msra.mxu0 0.0
    %360 = vmatprep.subr.mxu0 0.0
    %361 = vmatpush1.msra.mxu0 0.0
    %362 = vmatprep.subr.mxu0 0.0
    %363 = vmatpush1.msra.mxu0 0.0
    %364 = vmatprep.subr.mxu0 0.0
    %365 = vmatpush1.msra.mxu0 0.0
    %366 = vmatprep.subr.mxu0 0.0
    %367 = vmatpush1.msra.mxu0 0.0
    %368 = vmatprep.subr.mxu0 0.0
    %369 = vmatpush1.msra.mxu0 0.0
    %370 = vmatprep.subr.mxu0 0.0
    %371 = vmatpush1.msra.mxu0 0.0
    %372 = vmatprep.subr.mxu0 0.0
    %373 = vmatpush1.msra.mxu0 0.0
    %374 = vmatprep.subr.mxu0 0.0
    %375 = vmatpush1.msra.mxu0 0.0
    %376 = vmatprep.subr.mxu0 0.0
    %377 = vmatpush1.msra.mxu0 0.0
    %378 = vmatprep.subr.mxu0 0.0
    %379 = vmatpush1.msra.mxu0 0.0
    %380 = vmatprep.mubr.f32.mxu0 0.0
    %381 = vmatmul.mubr.f32.gmra.mrb[0].mxu0 %v296
    %v382 = vpop.f32.mrb[0].mxu0
    %v383 = vadd.f32 0.0, %v382
    %v384 = vpop.f32.mrb[0].mxu0
    %385 = vdwg.mxu0
    %386 = vst [vmem:[#allocation7] sm:$0xff] %v383
    // Predicated region
    $region18: #{tpu_custom_call.1} parent=1 // pred_check
      _
    $region19: #{tpu_custom_call.1} parent=1 // pred_check_branch
      %388 = sbr.rel (0) target = $region21
    $region20: #{tpu_custom_call.1} parent=1 // pred_region
      %s390 = ssub.s32 128, 128
      %391 = vsyncadd [#allocation4], %s390
      %s393 = sshll.u32 [#allocation7], 4
      %s394 = int_to_ptr.vmem [resolvable:$true] %s393
      %396 = dma.vmem_to_hbm [thread:$0]  %s394, 128, %s2, [#allocation4]
    $region21: #{tpu_custom_call.1} parent=1 // pred_fallthru
      _
    // Predicated region
    $region22: #{tpu_custom_call.1} parent=1 // pred_check
      _
    $region23: #{tpu_custom_call.1} parent=1 // pred_check_branch
      %398 = sbr.rel (0) target = $region25
    $region24: #{tpu_custom_call.1} parent=1 // pred_region
      %399 = dma.done [#allocation4], 128
    $region25: #{tpu_custom_call.1} parent=1 // pred_fallthru
      _
    %400 = vsyncpa [#allocation3], 1
    %401 = vsyncpa [#allocation6], 1
    %402 = vsyncpa [#allocation4], 1

</llo_original>
